<compile_context>
chip_gen: v7x
topology: tpu7x:2x2x1
jax: 0.10.0
libtpu: 0.0.40
codegen_flags: <defaults>
</compile_context>

<pallas_src>
import functools

import jax
import jax.numpy as jnp
from jax.experimental import pallas as pl
from jax.experimental.pallas import tpu as pltpu

HIDDEN_SIZE = 128    # LSTM hidden state size (MLP input width)
INTERMEDIATE = 256   # first Linear width
LABEL_SIZE = 10      # stand-in for len(set(labels)) from the .npy file (synthetic)


def _round_up(x, m):
    return (x + m - 1) // m * m


def mlp_kernel(x_ref, w1_ref, b1_ref, w2_ref, b2_ref, o_ref):
    # x_ref : (TILE_M, 128)        f32   (cast to bf16 in-kernel)
    # w1_ref: (128, 256)           bf16  (VMEM-resident across the whole grid)
    # b1_ref: (1, 256)             f32
    # w2_ref: (256, LABEL_SIZE)    bf16  (VMEM-resident)
    # b2_ref: (1, LABEL_SIZE)      f32
    # o_ref : (TILE_M, LABEL_SIZE) f32   (narrow writeback)
    x = x_ref[...].astype(jnp.bfloat16)
    h = jnp.dot(x, w1_ref[...], preferred_element_type=jnp.float32)
    h = jnp.maximum(h + b1_ref[...], 0.0)            # bias + ReLU in f32
    y = jnp.dot(h.astype(jnp.bfloat16), w2_ref[...],
                preferred_element_type=jnp.float32)
    o_ref[...] = (y + b2_ref[...]).astype(o_ref.dtype)


def prepare_params(w1, b1, w2, b2):
    """Cast MXU operands to bf16; keep biases in f32. Do once."""
    w1_p = w1.astype(jnp.bfloat16)                              # (128, 256)
    b1_p = b1.reshape(1, INTERMEDIATE).astype(jnp.float32)      # (1, 256)
    w2_p = w2.astype(jnp.bfloat16)                              # (256, LABEL_SIZE)
    b2_p = b2.reshape(1, LABEL_SIZE).astype(jnp.float32)        # (1, LABEL_SIZE)
    return w1_p, b1_p, w2_p, b2_p


@functools.partial(jax.jit, static_argnames=("tile_m",))
def mlp_forward_batched(x, w1_p, b1_p, w2_p, b2_p, *, tile_m=2048):
    """x: (B, HIDDEN_SIZE) f32. Returns (B, LABEL_SIZE) f32."""
    B = x.shape[0]
    rows = _round_up(B, 8)               # f32 input -> sublane multiple of 8
    tile_m = min(tile_m, rows)
    # v7x megacore: keep >= 2 parallel grid steps once the batch is big enough
    # (also restores input/output DMA pipelining overlap).
    if rows // tile_m < 2 and rows >= 256:
        tile_m = _round_up((rows + 1) // 2, 8)
    padded_b = _round_up(B, tile_m)

    x_p = x if padded_b == B else jnp.pad(x, ((0, padded_b - B), (0, 0)))
    grid = (padded_b // tile_m,)

    cost = pl.CostEstimate(
        flops=2 * padded_b * (HIDDEN_SIZE * INTERMEDIATE
                              + INTERMEDIATE * LABEL_SIZE),
        transcendentals=0,
        bytes_accessed=(padded_b * HIDDEN_SIZE * 4        # x f32 read
                        + w1_p.size * 2 + w2_p.size * 2   # bf16 weights (once)
                        + b1_p.size * 4 + b2_p.size * 4
                        + padded_b * LABEL_SIZE * 4),     # narrow f32 output
    )

    out = pl.pallas_call(
        mlp_kernel,
        out_shape=jax.ShapeDtypeStruct((padded_b, LABEL_SIZE), jnp.float32),
        grid_spec=pltpu.PrefetchScalarGridSpec(
            num_scalar_prefetch=0,
            grid=grid,
            in_specs=[
                pl.BlockSpec((tile_m, HIDDEN_SIZE), lambda i: (i, 0)),        # x tile (f32)
                pl.BlockSpec((HIDDEN_SIZE, INTERMEDIATE), lambda i: (0, 0)),  # w1 resident
                pl.BlockSpec((1, INTERMEDIATE), lambda i: (0, 0)),            # b1
                pl.BlockSpec((INTERMEDIATE, LABEL_SIZE), lambda i: (0, 0)),   # w2 resident
                pl.BlockSpec((1, LABEL_SIZE), lambda i: (0, 0)),              # b2
            ],
            out_specs=pl.BlockSpec((tile_m, LABEL_SIZE), lambda i: (i, 0)),
        ),
        compiler_params=pltpu.CompilerParams(
            dimension_semantics=("parallel",),   # shard batch tiles across TCs on v7x
        ),
        cost_estimate=cost,
    )(x_p, w1_p, b1_p, w2_p, b2_p)

    return out[:B] if padded_b != B else out


def mlp_forward(x, w1_p, b1_p, w2_p, b2_p):
    """Module-equivalent forward: x.view(-1) -> MLP -> (LABEL_SIZE,) output.

    Note: a B=1 pallas_call is dominated by launch/DMA setup; in production
    this path should either batch multiple samples per call or fall back to
    plain jnp so XLA fuses it with the LSTM epilogue.  Kept on the Pallas
    path here to exercise the kernel.
    """
    x_flat = x.reshape(-1).astype(jnp.float32)
    assert x_flat.shape[0] == HIDDEN_SIZE, "flattened input must have 128 elems"
    return mlp_forward_batched(x_flat.reshape(1, HIDDEN_SIZE),
                               w1_p, b1_p, w2_p, b2_p)[0]


def init_params(key):
    """Deterministic init mimicking nn.Linear's U(-1/sqrt(fan_in), 1/sqrt(fan_in))."""
    k1, k2, k3, k4 = jax.random.split(key, 4)
    lim1 = 1.0 / jnp.sqrt(jnp.float32(HIDDEN_SIZE))
    lim2 = 1.0 / jnp.sqrt(jnp.float32(INTERMEDIATE))
    # stored as (in, out): transpose of PyTorch's (out, in) weight layout
    w1 = jax.random.uniform(k1, (HIDDEN_SIZE, INTERMEDIATE), jnp.float32, -lim1, lim1)
    b1 = jax.random.uniform(k2, (INTERMEDIATE,), jnp.float32, -lim1, lim1)
    w2 = jax.random.uniform(k3, (INTERMEDIATE, LABEL_SIZE), jnp.float32, -lim2, lim2)
    b2 = jax.random.uniform(k4, (LABEL_SIZE,), jnp.float32, -lim2, lim2)
    return w1, b1, w2, b2


if __name__ == "__main__":
    key = jax.random.PRNGKey(0)
    kx, kp = jax.random.split(key)

    w1, b1, w2, b2 = init_params(kp)
    params = prepare_params(w1, b1, w2, b2)

    # reference in plain JAX, following the same bf16 rounding of MXU operands
    def ref_fn(x32):
        xb16 = x32.astype(jnp.bfloat16).astype(jnp.float32)
        w1b = w1.astype(jnp.bfloat16).astype(jnp.float32)
        w2b = w2.astype(jnp.bfloat16).astype(jnp.float32)
        h = jnp.maximum(xb16 @ w1b + b1, 0.0)
        hb = h.astype(jnp.bfloat16).astype(jnp.float32)
        return hb @ w2b + b2

    # --- batched path with default (large) tile: grid of 1, small batch ---
    B = 64
    xb = jax.random.normal(kx, (B, HIDDEN_SIZE), jnp.float32)
    out_b = jax.block_until_ready(mlp_forward_batched(xb, *params))
    ref_b = ref_fn(xb)
    assert out_b.shape == (B, LABEL_SIZE)
    assert jnp.allclose(out_b, ref_b, atol=2e-3, rtol=2e-3), "batched mismatch vs reference"

    # --- ragged batch + explicit small tile: exercises padding and a >1 grid ---
    B2 = 70
    xb2 = jax.random.normal(jax.random.PRNGKey(7), (B2, HIDDEN_SIZE), jnp.float32)
    out_b2 = jax.block_until_ready(mlp_forward_batched(xb2, *params, tile_m=32))
    ref_b2 = ref_fn(xb2)
    assert out_b2.shape == (B2, LABEL_SIZE)
    assert jnp.allclose(out_b2, ref_b2, atol=2e-3, rtol=2e-3), "ragged batch mismatch vs reference"

    # --- single-sample path matching MLP.forward (x.view(-1)) ---
    x1 = xb[0].reshape(1, HIDDEN_SIZE)
    out_1 = jax.block_until_ready(mlp_forward(x1, *params))
    assert out_1.shape == (LABEL_SIZE,)
    assert jnp.allclose(out_1, ref_fn(x1)[0], atol=2e-3, rtol=2e-3), "single mismatch vs reference"

    print("KERNEL_OK")
</pallas_src>

<mosaic_0001>
module attributes {stable_mosaic.version = 11 : i64} {
  func.func @mlp_kernel(%arg0: i32, %arg1: memref<64x128xf32, #tpu.memory_space<vmem>>, %arg2: memref<128x256xbf16, #tpu.memory_space<vmem>>, %arg3: memref<1x256xf32, #tpu.memory_space<vmem>>, %arg4: memref<256x10xbf16, #tpu.memory_space<vmem>>, %arg5: memref<1x10xf32, #tpu.memory_space<vmem>>, %arg6: memref<64x10xf32, #tpu.memory_space<vmem>>) attributes {dimension_semantics = [#tpu.dimension_semantics<parallel>], iteration_bounds = array<i64: 1>, scalar_prefetch = 0 : i64, scratch_operands = 0 : i64, tpu.core_type = #tpu.core_type<tc>, window_params = [{transform_indices = @transform_0, window_bounds = array<i64: 64, 128>}, {pipeline_mode = #tpu.pipeline_mode<synchronous>, transform_indices = @transform_1, window_bounds = array<i64: 128, 256>}, {pipeline_mode = #tpu.pipeline_mode<synchronous>, transform_indices = @transform_2, window_bounds = array<i64: 1, 256>}, {pipeline_mode = #tpu.pipeline_mode<synchronous>, transform_indices = @transform_3, window_bounds = array<i64: 256, 10>}, {pipeline_mode = #tpu.pipeline_mode<synchronous>, transform_indices = @transform_4, window_bounds = array<i64: 1, 10>}, {transform_indices = @transform_5, window_bounds = array<i64: 64, 10>}]} {
    %c0 = arith.constant 0 : index
    %c0_0 = arith.constant 0 : index
    %0 = vector.load %arg1[%c0, %c0_0] : memref<64x128xf32, #tpu.memory_space<vmem>>, vector<64x128xf32>
    %1 = arith.truncf %0 : vector<64x128xf32> to vector<64x128xbf16>
    %c0_1 = arith.constant 0 : index
    %c0_2 = arith.constant 0 : index
    %2 = vector.load %arg2[%c0_1, %c0_2] : memref<128x256xbf16, #tpu.memory_space<vmem>>, vector<128x256xbf16>
    %cst = arith.constant dense<0.000000e+00> : vector<64x256xf32>
    %3 = tpu.matmul %1, %2, %cst {dimension_numbers = #tpu.dot_dimension_numbers<[1], [0], [0], [1], [0, 0, 1, 1], [], []>} : vector<64x128xbf16>, vector<128x256xbf16>, vector<64x256xf32> -> vector<64x256xf32>
    %c0_3 = arith.constant 0 : index
    %c0_4 = arith.constant 0 : index
    %4 = vector.load %arg3[%c0_3, %c0_4] : memref<1x256xf32, #tpu.memory_space<vmem>>, vector<1x256xf32>
    %5 = vector.broadcast %4 : vector<1x256xf32> to vector<64x256xf32>
    %6 = arith.addf %3, %5 : vector<64x256xf32>
    %cst_5 = arith.constant 0.000000e+00 : f32
    %7 = vector.broadcast %cst_5 : f32 to vector<64x256xf32>
    %8 = arith.maximumf %6, %7 : vector<64x256xf32>
    %9 = arith.truncf %8 : vector<64x256xf32> to vector<64x256xbf16>
    %c0_6 = arith.constant 0 : index
    %c0_7 = arith.constant 0 : index
    %10 = vector.load %arg4[%c0_6, %c0_7] : memref<256x10xbf16, #tpu.memory_space<vmem>>, vector<256x10xbf16>
    %cst_8 = arith.constant dense<0.000000e+00> : vector<64x10xf32>
    %11 = tpu.matmul %9, %10, %cst_8 {dimension_numbers = #tpu.dot_dimension_numbers<[1], [0], [0], [1], [0, 0, 1, 1], [], []>} : vector<64x256xbf16>, vector<256x10xbf16>, vector<64x10xf32> -> vector<64x10xf32>
    %c0_9 = arith.constant 0 : index
    %c0_10 = arith.constant 0 : index
    %12 = vector.load %arg5[%c0_9, %c0_10] : memref<1x10xf32, #tpu.memory_space<vmem>>, vector<1x10xf32>
    %13 = vector.broadcast %12 : vector<1x10xf32> to vector<64x10xf32>
    %14 = arith.addf %11, %13 : vector<64x10xf32>
    %c0_11 = arith.constant 0 : index
    %c0_12 = arith.constant 0 : index
    %15 = vector.load %arg6[%c0_11, %c0_12] : memref<64x10xf32, #tpu.memory_space<vmem>>, vector<64x10xf32>
    tpu.vector_store %arg6[%c0_11, %c0_12], %14 {strides = array<i32>} : memref<64x10xf32, #tpu.memory_space<vmem>>, vector<64x10xf32>,
    return
  }
  func.func @transform_0(%arg0: i32) -> (i32, i32) {
    %c0_i32 = arith.constant 0 : i32
    %c0_i32_0 = arith.constant 0 : i32
    return %arg0, %c0_i32 : i32, i32
  }
  func.func @transform_1(%arg0: i32) -> (i32, i32) {
    %c0_i32 = arith.constant 0 : i32
    %c0_i32_0 = arith.constant 0 : i32
    %c0_i32_1 = arith.constant 0 : i32
    return %c0_i32, %c0_i32_0 : i32, i32
  }
  func.func @transform_2(%arg0: i32) -> (i32, i32) {
    %c0_i32 = arith.constant 0 : i32
    %c0_i32_0 = arith.constant 0 : i32
    %c0_i32_1 = arith.constant 0 : i32
    return %c0_i32, %c0_i32_0 : i32, i32
  }
  func.func @transform_3(%arg0: i32) -> (i32, i32) {
    %c0_i32 = arith.constant 0 : i32
    %c0_i32_0 = arith.constant 0 : i32
    %c0_i32_1 = arith.constant 0 : i32
    return %c0_i32, %c0_i32_0 : i32, i32
  }
  func.func @transform_4(%arg0: i32) -> (i32, i32) {
    %c0_i32 = arith.constant 0 : i32
    %c0_i32_0 = arith.constant 0 : i32
    %c0_i32_1 = arith.constant 0 : i32
    return %c0_i32, %c0_i32_0 : i32, i32
  }
  func.func @transform_5(%arg0: i32) -> (i32, i32) {
    %c0_i32 = arith.constant 0 : i32
    %c0_i32_0 = arith.constant 0 : i32
    return %arg0, %c0_i32 : i32, i32
  }
}

</mosaic_0001>

<llo_original>
// kernel: mlp_forward_batched.1
$region0: #{mlp_forward_batched.1}
  #allocation0 [shape = 'u32[]', space=smem, size = 0x4, offset = 0x4, fixed_abs, tag = 'smem constant byte address 0x4 - core index']
  #allocation1 [shape = 'u32[144,128]{1,0:T(1,128)}', space=vmem, size = 0x12000, scoped, tag = 'internal scratch']
  %s0 = inlined_call_operand.hbm [shape: f32[64,128], index: 0, kind: input, shape index: {}]
  %s1 = inlined_call_operand.vmem [shape: bf16[128,256], index: 1, kind: input, shape index: {}]
  %s2 = inlined_call_operand.vmem [shape: f32[1,256], index: 2, kind: input, shape index: {}]
  %s3 = inlined_call_operand.vmem [shape: bf16[256,10], index: 3, kind: input, shape index: {}]
  %s4 = inlined_call_operand.vmem [shape: f32[1,10], index: 4, kind: input, shape index: {}]
  %s5 = inlined_call_operand.vmem [shape: f32[64,10], index: 5, kind: output, shape index: {}]
  %s6 = sld [smem:[#allocation0]]
  $region34: #{mlp_forward_batched.1} parent=0
    _
  %s8 = ssub.s32 1, %s6
  %s9 = scalar_select 0, %s8, %s6
  $region1: #{mlp_forward_batched.1} parent=0
    #allocation2 [shape = 'u8[32768]{0}', space=vmem, size = 0x8000, scoped, tag = 'input window, operand 0, single buffered']
    #allocation3 [shape = 's32[1]{0}', space=sflag, size = 0x4, scoped, tag = 'scoped memory for mlp_forward_batched.1']
    %10 = vsyncpa [#allocation3], 0
    // Predicated region
    $region2: #{mlp_forward_batched.1} parent=1 // pred_check
      _
    $region3: #{mlp_forward_batched.1} parent=1 // pred_check_branch
      %12 = sbr.rel (0) target = $region5
    $region4: #{mlp_forward_batched.1} parent=1 // pred_region
      %s14 = ssub.s32 1024, 1024
      %15 = vsyncadd [#allocation3], %s14
      %s16 = sshll.u32 [#allocation2], 4
      %s17 = int_to_ptr.vmem [resolvable:$true] %s16
      %22 = dma.hbm_to_vmem [thread:$0]  %s0, 1024, %s17, [#allocation3], 128, 128, 8
    $region5: #{mlp_forward_batched.1} parent=1 // pred_fallthru
      _
    // Predicated region
    $region6: #{mlp_forward_batched.1} parent=1 // pred_check
      _
    $region7: #{mlp_forward_batched.1} parent=1 // pred_check_branch
      %24 = sbr.rel (0) target = $region9
    $region8: #{mlp_forward_batched.1} parent=1 // pred_region
      _
    $region9: #{mlp_forward_batched.1} parent=1 // pred_fallthru
      _
    // Predicated region
    $region10: #{mlp_forward_batched.1} parent=1 // pred_check
      _
    $region11: #{mlp_forward_batched.1} parent=1 // pred_check_branch
      %26 = sbr.rel (0) target = $region13
    $region12: #{mlp_forward_batched.1} parent=1 // pred_region
      _
    $region13: #{mlp_forward_batched.1} parent=1 // pred_fallthru
      _
    // Predicated region
    $region14: #{mlp_forward_batched.1} parent=1 // pred_check
      _
    $region15: #{mlp_forward_batched.1} parent=1 // pred_check_branch
      %28 = sbr.rel (0) target = $region17
    $region16: #{mlp_forward_batched.1} parent=1 // pred_region
      _
    $region17: #{mlp_forward_batched.1} parent=1 // pred_fallthru
      _
    // Predicated region
    $region18: #{mlp_forward_batched.1} parent=1 // pred_check
      _
    $region19: #{mlp_forward_batched.1} parent=1 // pred_check_branch
      %30 = sbr.rel (0) target = $region21
    $region20: #{mlp_forward_batched.1} parent=1 // pred_region
      _
    $region21: #{mlp_forward_batched.1} parent=1 // pred_fallthru
      _
    // Predicated region
    $region22: #{mlp_forward_batched.1} parent=1 // pred_check
      _
    $region23: #{mlp_forward_batched.1} parent=1 // pred_check_branch
      %32 = sbr.rel (0) target = $region25
    $region24: #{mlp_forward_batched.1} parent=1 // pred_region
      %33 = dma.done [#allocation3], 1024
    $region25: #{mlp_forward_batched.1} parent=1 // pred_fallthru
      _
    %v35 = vld [vmem:[#allocation2] sm:$0xff]
    %v36 = vld [vmem:[#allocation2 + $0x8] sm:$0xff]
    %v37 = vld [vmem:[#allocation2 + $0x10] sm:$0xff]
    %v38 = vld [vmem:[#allocation2 + $0x18] sm:$0xff]
    %v39 = vld [vmem:[#allocation2 + $0x20] sm:$0xff]
    %v40 = vld [vmem:[#allocation2 + $0x28] sm:$0xff]
    %v41 = vld [vmem:[#allocation2 + $0x30] sm:$0xff]
    %v42 = vld [vmem:[#allocation2 + $0x38] sm:$0xff]
    %v43 = vpack.c.bf16 %v36, %v35
    %v44 = vpack.c.bf16 %v38, %v37
    %v45 = vpack.c.bf16 %v40, %v39
    %v46 = vpack.c.bf16 %v42, %v41
    %v47 = vld [vmem:[%s1] sm:$0xff]
    %v48 = vld [vmem:[%s1 + $0x8] sm:$0xff]
    %v49 = vld [vmem:[%s1 + $0x10] sm:$0xff]
    %v50 = vld [vmem:[%s1 + $0x18] sm:$0xff]
    %v51 = vld [vmem:[%s1 + $0x20] sm:$0xff]
    %v52 = vld [vmem:[%s1 + $0x28] sm:$0xff]
    %v53 = vld [vmem:[%s1 + $0x30] sm:$0xff]
    %v54 = vld [vmem:[%s1 + $0x38] sm:$0xff]
    %v55 = vld [vmem:[%s1 + $0x40] sm:$0xff]
    %v56 = vld [vmem:[%s1 + $0x48] sm:$0xff]
    %v57 = vld [vmem:[%s1 + $0x50] sm:$0xff]
    %v58 = vld [vmem:[%s1 + $0x58] sm:$0xff]
    %v59 = vld [vmem:[%s1 + $0x60] sm:$0xff]
    %v60 = vld [vmem:[%s1 + $0x68] sm:$0xff]
    %v61 = vld [vmem:[%s1 + $0x70] sm:$0xff]
    %v62 = vld [vmem:[%s1 + $0x78] sm:$0xff]
    %v63 = vld [vmem:[%s2] sm:$0x3]
    %v65 = vlaneseq
    %v66 = vshrl.u32 %v65, 7
    %v67 = vsub.s32 0, %v66
    %v68 = vrot.slane %v63, %v67
    %v69 = vlaneseq
    %v70 = vshrl.u32 %v69, 7
    %v71 = vsub.s32 1, %v70
    %v72 = vrot.slane %v63, %v71
    %v91 = vunpack.c.l.b16 %v47
    %v92 = vunpack.c.h.b16 %v47
    %v93 = vunpack.c.l.b16 %v48
    %v94 = vunpack.c.h.b16 %v48
    %v95 = vunpack.c.l.b16 %v49
    %v96 = vunpack.c.h.b16 %v49
    %v97 = vunpack.c.l.b16 %v50
    %v98 = vunpack.c.h.b16 %v50
    %v99 = vunpack.c.l.b16 %v51
    %v100 = vunpack.c.h.b16 %v51
    %v101 = vunpack.c.l.b16 %v52
    %v102 = vunpack.c.h.b16 %v52
    %v103 = vunpack.c.l.b16 %v53
    %v104 = vunpack.c.h.b16 %v53
    %v105 = vunpack.c.l.b16 %v54
    %v106 = vunpack.c.h.b16 %v54
    %v107 = vunpack.c.l.b16 %v55
    %v108 = vunpack.c.h.b16 %v55
    %v109 = vunpack.c.l.b16 %v56
    %v110 = vunpack.c.h.b16 %v56
    %v111 = vunpack.c.l.b16 %v57
    %v112 = vunpack.c.h.b16 %v57
    %v113 = vunpack.c.l.b16 %v58
    %v114 = vunpack.c.h.b16 %v58
    %v115 = vunpack.c.l.b16 %v59
    %v116 = vunpack.c.h.b16 %v59
    %v117 = vunpack.c.l.b16 %v60
    %v118 = vunpack.c.h.b16 %v60
    %v119 = vunpack.c.l.b16 %v61
    %v120 = vunpack.c.h.b16 %v61
    %v121 = vunpack.c.l.b16 %v62
    %v122 = vunpack.c.h.b16 %v62
    %v123 = vpack.c.b16 %v93, %v91
    %v124 = vpack.c.b16 %v94, %v92
    %v125 = vpack.c.b16 %v97, %v95
    %v126 = vpack.c.b16 %v98, %v96
    %v127 = vpack.c.b16 %v101, %v99
    %v128 = vpack.c.b16 %v102, %v100
    %v129 = vpack.c.b16 %v105, %v103
    %v130 = vpack.c.b16 %v106, %v104
    %v131 = vpack.c.b16 %v109, %v107
    %v132 = vpack.c.b16 %v110, %v108
    %v133 = vpack.c.b16 %v113, %v111
    %v134 = vpack.c.b16 %v114, %v112
    %v135 = vpack.c.b16 %v117, %v115
    %v136 = vpack.c.b16 %v118, %v116
    %v137 = vpack.c.b16 %v121, %v119
    %v138 = vpack.c.b16 %v122, %v120
    %155 = vmatprep.subr.bf16.mxu0 %v124
    %156 = vmatpush1.bf16.msra.mxu0 %v123
    %157 = vmatprep.subr.bf16.mxu0 %v126
    %158 = vmatpush1.bf16.msra.mxu0 %v125
    %159 = vmatprep.subr.bf16.mxu0 %v128
    %160 = vmatpush1.bf16.msra.mxu0 %v127
    %161 = vmatprep.subr.bf16.mxu0 %v130
    %162 = vmatpush1.bf16.msra.mxu0 %v129
    %163 = vmatprep.subr.bf16.mxu0 %v132
    %164 = vmatpush1.bf16.msra.mxu0 %v131
    %165 = vmatprep.subr.bf16.mxu0 %v134
    %166 = vmatpush1.bf16.msra.mxu0 %v133
    %167 = vmatprep.subr.bf16.mxu0 %v136
    %168 = vmatpush1.bf16.msra.mxu0 %v135
    %169 = vmatprep.subr.bf16.mxu0 %v138
    %170 = vmatpush1.bf16.msra.mxu0 %v137
    %171 = vmatprep.subr.bf16.mxu0 0
    %172 = vmatpush1.bf16.msra.mxu0 0
    %173 = vmatprep.subr.bf16.mxu0 0
    %174 = vmatpush1.bf16.msra.mxu0 0
    %175 = vmatprep.subr.bf16.mxu0 0
    %176 = vmatpush1.bf16.msra.mxu0 0
    %177 = vmatprep.subr.bf16.mxu0 0
    %178 = vmatpush1.bf16.msra.mxu0 0
    %179 = vmatprep.subr.bf16.mxu0 0
    %180 = vmatpush1.bf16.msra.mxu0 0
    %181 = vmatprep.subr.bf16.mxu0 0
    %182 = vmatpush1.bf16.msra.mxu0 0
    %183 = vmatprep.subr.bf16.mxu0 0
    %184 = vmatpush1.bf16.msra.mxu0 0
    %185 = vmatprep.subr.bf16.mxu0 0
    %186 = vmatpush1.bf16.msra.mxu0 0
    %187 = vmatprep.mubr.bf16.mxu0 0
    %188 = vmatmul.mubr.bf16.gmra.mrb[0].mxu0 %v43
    %v189 = vpop.f32.mrb[0].mxu0
    %v190 = vadd.f32 %v68, %v189
    %v191 = vpop.f32.mrb[0].mxu0
    %v192 = vadd.f32 %v72, %v191
    %v193 = vpop.f32.mrb[0].mxu0
    %v194 = vadd.f32 %v68, %v193
    %v195 = vpop.f32.mrb[0].mxu0
    %v196 = vadd.f32 %v72, %v195
    %197 = vmatprep.mubr.bf16.mxu0 0
    %198 = vmatmul.mubr.bf16.gmra.mrb[0].mxu0 %v44
    %v199 = vpop.f32.mrb[0].mxu0
    %v200 = vadd.f32 %v68, %v199
    %v201 = vpop.f32.mrb[0].mxu0
    %v202 = vadd.f32 %v72, %v201
    %v203 = vpop.f32.mrb[0].mxu0
    %v204 = vadd.f32 %v68, %v203
    %v205 = vpop.f32.mrb[0].mxu0
    %v206 = vadd.f32 %v72, %v205
    %207 = vmatprep.mubr.bf16.mxu0 0
    %208 = vmatmul.mubr.bf16.gmra.mrb[0].mxu0 %v45
    %v209 = vpop.f32.mrb[0].mxu0
    %v210 = vadd.f32 %v68, %v209
    %v211 = vpop.f32.mrb[0].mxu0
    %v212 = vadd.f32 %v72, %v211
    %v213 = vpop.f32.mrb[0].mxu0
    %v214 = vadd.f32 %v68, %v213
    %v215 = vpop.f32.mrb[0].mxu0
    %v216 = vadd.f32 %v72, %v215
    %217 = vmatprep.mubr.bf16.mxu0 0
    %218 = vmatmul.mubr.bf16.gmra.mrb[0].mxu0 %v46
    %v219 = vpop.f32.mrb[0].mxu0
    %v220 = vadd.f32 %v68, %v219
    %v221 = vpop.f32.mrb[0].mxu0
    %v222 = vadd.f32 %v72, %v221
    %v223 = vpop.f32.mrb[0].mxu0
    %v224 = vadd.f32 %v68, %v223
    %v225 = vpop.f32.mrb[0].mxu0
    %v226 = vadd.f32 %v72, %v225
    %227 = vdwg.mxu0
    %v228 = vmax.f32 %v190, 0.0
    %v229 = vmax.f32 %v192, 0.0
    %v230 = vmax.f32 %v194, 0.0
    %v231 = vmax.f32 %v196, 0.0
    %v232 = vmax.f32 %v200, 0.0
    %v233 = vmax.f32 %v202, 0.0
    %v234 = vmax.f32 %v204, 0.0
    %v235 = vmax.f32 %v206, 0.0
    %v236 = vmax.f32 %v210, 0.0
    %v237 = vmax.f32 %v212, 0.0
    %v238 = vmax.f32 %v214, 0.0
    %v239 = vmax.f32 %v216, 0.0
    %v240 = vmax.f32 %v220, 0.0
    %v241 = vmax.f32 %v222, 0.0
    %v242 = vmax.f32 %v224, 0.0
    %v243 = vmax.f32 %v226, 0.0
    %v244 = vpack.c.bf16 %v230, %v228
    %v245 = vpack.c.bf16 %v231, %v229
    %v246 = vpack.c.bf16 %v234, %v232
    %v247 = vpack.c.bf16 %v235, %v233
    %v248 = vpack.c.bf16 %v238, %v236
    %v249 = vpack.c.bf16 %v239, %v237
    %v250 = vpack.c.bf16 %v242, %v240
    %v251 = vpack.c.bf16 %v243, %v241
    %v252 = vld [vmem:[%s3] sm:$0xf]
    %v253 = vld [vmem:[%s3 + $0x4] sm:$0xf]
    %v254 = vld [vmem:[%s3 + $0x8] sm:$0xf]
    %v255 = vld [vmem:[%s3 + $0xc] sm:$0xf]
    %v256 = vld [vmem:[%s3 + $0x10] sm:$0xf]
    %v257 = vld [vmem:[%s3 + $0x14] sm:$0xf]
    %v258 = vld [vmem:[%s3 + $0x18] sm:$0xf]
    %v259 = vld [vmem:[%s3 + $0x1c] sm:$0xf]
    %v260 = vld [vmem:[%s3 + $0x20] sm:$0xf]
    %v261 = vld [vmem:[%s3 + $0x24] sm:$0xf]
    %v262 = vld [vmem:[%s3 + $0x28] sm:$0xf]
    %v263 = vld [vmem:[%s3 + $0x2c] sm:$0xf]
    %v264 = vld [vmem:[%s3 + $0x30] sm:$0xf]
    %v265 = vld [vmem:[%s3 + $0x34] sm:$0xf]
    %v266 = vld [vmem:[%s3 + $0x38] sm:$0xf]
    %v267 = vld [vmem:[%s3 + $0x3c] sm:$0xf]
    %v268 = vld [vmem:[%s3 + $0x40] sm:$0xf]
    %v269 = vld [vmem:[%s3 + $0x44] sm:$0xf]
    %v270 = vld [vmem:[%s3 + $0x48] sm:$0xf]
    %v271 = vld [vmem:[%s3 + $0x4c] sm:$0xf]
    %v272 = vld [vmem:[%s3 + $0x50] sm:$0xf]
    %v273 = vld [vmem:[%s3 + $0x54] sm:$0xf]
    %v274 = vld [vmem:[%s3 + $0x58] sm:$0xf]
    %v275 = vld [vmem:[%s3 + $0x5c] sm:$0xf]
    %v276 = vld [vmem:[%s3 + $0x60] sm:$0xf]
    %v277 = vld [vmem:[%s3 + $0x64] sm:$0xf]
    %v278 = vld [vmem:[%s3 + $0x68] sm:$0xf]
    %v279 = vld [vmem:[%s3 + $0x6c] sm:$0xf]
    %v280 = vld [vmem:[%s3 + $0x70] sm:$0xf]
    %v281 = vld [vmem:[%s3 + $0x74] sm:$0xf]
    %v282 = vld [vmem:[%s3 + $0x78] sm:$0xf]
    %v283 = vld [vmem:[%s3 + $0x7c] sm:$0xf]
    %v284 = vld [vmem:[%s4] sm:$0x1]
    %v286 = vlaneseq
    %v287 = vshrl.u32 %v286, 7
    %v288 = vsub.s32 0, %v287
    %v289 = vrot.slane %v284, %v288
    %v323 = vunpack.c.l.b16 %v252
    %v324 = vunpack.c.l.b16 %v253
    %v325 = vunpack.c.l.b16 %v254
    %v326 = vunpack.c.l.b16 %v255
    %v327 = vunpack.c.l.b16 %v256
    %v328 = vunpack.c.l.b16 %v257
    %v329 = vunpack.c.l.b16 %v258
    %v330 = vunpack.c.l.b16 %v259
    %v331 = vunpack.c.l.b16 %v260
    %v332 = vunpack.c.l.b16 %v261
    %v333 = vunpack.c.l.b16 %v262
    %v334 = vunpack.c.l.b16 %v263
    %v335 = vunpack.c.l.b16 %v264
    %v336 = vunpack.c.l.b16 %v265
    %v337 = vunpack.c.l.b16 %v266
    %v338 = vunpack.c.l.b16 %v267
    %v339 = vunpack.c.l.b16 %v268
    %v340 = vunpack.c.l.b16 %v269
    %v341 = vunpack.c.l.b16 %v270
    %v342 = vunpack.c.l.b16 %v271
    %v343 = vunpack.c.l.b16 %v272
    %v344 = vunpack.c.l.b16 %v273
    %v345 = vunpack.c.l.b16 %v274
    %v346 = vunpack.c.l.b16 %v275
    %v347 = vunpack.c.l.b16 %v276
    %v348 = vunpack.c.l.b16 %v277
    %v349 = vunpack.c.l.b16 %v278
    %v350 = vunpack.c.l.b16 %v279
    %v351 = vunpack.c.l.b16 %v280
    %v352 = vunpack.c.l.b16 %v281
    %v353 = vunpack.c.l.b16 %v282
    %v354 = vunpack.c.l.b16 %v283
    %v355 = vpack.c.b16 %v324, %v323
    %v356 = vpack.c.b16 %v326, %v325
    %v357 = vpack.c.b16 %v328, %v327
    %v358 = vpack.c.b16 %v330, %v329
    %v359 = vpack.c.b16 %v332, %v331
    %v360 = vpack.c.b16 %v334, %v333
    %v361 = vpack.c.b16 %v336, %v335
    %v362 = vpack.c.b16 %v338, %v337
    %v363 = vpack.c.b16 %v340, %v339
    %v364 = vpack.c.b16 %v342, %v341
    %v365 = vpack.c.b16 %v344, %v343
    %v366 = vpack.c.b16 %v346, %v345
    %v367 = vpack.c.b16 %v348, %v347
    %v368 = vpack.c.b16 %v350, %v349
    %v369 = vpack.c.b16 %v352, %v351
    %v370 = vpack.c.b16 %v354, %v353
    %387 = vmatprep.subr.bf16.mxu0 0
    %388 = vmatpush1.bf16.msra.mxu0 %v355
    %389 = vmatprep.subr.bf16.mxu0 0
    %390 = vmatpush1.bf16.msra.mxu0 %v356
    %391 = vmatprep.subr.bf16.mxu0 0
    %392 = vmatpush1.bf16.msra.mxu0 %v357
    %393 = vmatprep.subr.bf16.mxu0 0
    %394 = vmatpush1.bf16.msra.mxu0 %v358
    %395 = vmatprep.subr.bf16.mxu0 0
    %396 = vmatpush1.bf16.msra.mxu0 %v359
    %397 = vmatprep.subr.bf16.mxu0 0
    %398 = vmatpush1.bf16.msra.mxu0 %v360
    %399 = vmatprep.subr.bf16.mxu0 0
    %400 = vmatpush1.bf16.msra.mxu0 %v361
    %401 = vmatprep.subr.bf16.mxu0 0
    %402 = vmatpush1.bf16.msra.mxu0 %v362
    %403 = vmatprep.subr.bf16.mxu0 0
    %404 = vmatpush1.bf16.msra.mxu0 %v363
    %405 = vmatprep.subr.bf16.mxu0 0
    %406 = vmatpush1.bf16.msra.mxu0 %v364
    %407 = vmatprep.subr.bf16.mxu0 0
    %408 = vmatpush1.bf16.msra.mxu0 %v365
    %409 = vmatprep.subr.bf16.mxu0 0
    %410 = vmatpush1.bf16.msra.mxu0 %v366
    %411 = vmatprep.subr.bf16.mxu0 0
    %412 = vmatpush1.bf16.msra.mxu0 %v367
    %413 = vmatprep.subr.bf16.mxu0 0
    %414 = vmatpush1.bf16.msra.mxu0 %v368
    %415 = vmatprep.subr.bf16.mxu0 0
    %416 = vmatpush1.bf16.msra.mxu0 %v369
    %417 = vmatprep.subr.bf16.mxu0 0
    %418 = vmatpush1.bf16.msra.mxu0 %v370
    %419 = vmatprep.mubr.bf16.mxu0 %v245
    %420 = vmatmul.mubr.bf16.gmra.mrb[0].mxu0 %v244
    %v421 = vpop.f32.mrb[0].mxu0
    %v422 = vadd.f32 %v289, %v421
    %v423 = vpop.f32.mrb[0].mxu0
    %v424 = vpop.f32.mrb[0].mxu0
    %v425 = vadd.f32 %v289, %v424
    %v426 = vpop.f32.mrb[0].mxu0
    %427 = vmatprep.mubr.bf16.mxu0 %v247
    %428 = vmatmul.mubr.bf16.gmra.mrb[0].mxu0 %v246
    %v429 = vpop.f32.mrb[0].mxu0
    %v430 = vadd.f32 %v289, %v429
    %v431 = vpop.f32.mrb[0].mxu0
    %v432 = vpop.f32.mrb[0].mxu0
    %v433 = vadd.f32 %v289, %v432
    %v434 = vpop.f32.mrb[0].mxu0
    %435 = vmatprep.mubr.bf16.mxu0 %v249
    %436 = vmatmul.mubr.bf16.gmra.mrb[0].mxu0 %v248
    %v437 = vpop.f32.mrb[0].mxu0
    %v438 = vadd.f32 %v289, %v437
    %v439 = vpop.f32.mrb[0].mxu0
    %v440 = vpop.f32.mrb[0].mxu0
    %v441 = vadd.f32 %v289, %v440
    %v442 = vpop.f32.mrb[0].mxu0
    %443 = vmatprep.mubr.bf16.mxu0 %v251
    %444 = vmatmul.mubr.bf16.gmra.mrb[0].mxu0 %v250
    %v445 = vpop.f32.mrb[0].mxu0
    %v446 = vadd.f32 %v289, %v445
    %v447 = vpop.f32.mrb[0].mxu0
    %v448 = vpop.f32.mrb[0].mxu0
    %v449 = vadd.f32 %v289, %v448
    %v450 = vpop.f32.mrb[0].mxu0
    %451 = vdwg.mxu0
    %vm452 = vcmask 80896
    %453 = vst.msk [vmem:[%s5] sm:$0xff] %vm452, %v422
    %454 = vst.msk [vmem:[%s5 + $0x8] sm:$0xff] %vm452, %v425
    %455 = vst.msk [vmem:[%s5 + $0x10] sm:$0xff] %vm452, %v430
    %456 = vst.msk [vmem:[%s5 + $0x18] sm:$0xff] %vm452, %v433
    %457 = vst.msk [vmem:[%s5 + $0x20] sm:$0xff] %vm452, %v438
    %458 = vst.msk [vmem:[%s5 + $0x28] sm:$0xff] %vm452, %v441
    %459 = vst.msk [vmem:[%s5 + $0x30] sm:$0xff] %vm452, %v446
    %460 = vst.msk [vmem:[%s5 + $0x38] sm:$0xff] %vm452, %v449
    // Predicated region
    $region26: #{mlp_forward_batched.1} parent=1 // pred_check
      _
    $region27: #{mlp_forward_batched.1} parent=1 // pred_check_branch
      %462 = sbr.rel (0) target = $region29
    $region28: #{mlp_forward_batched.1} parent=1 // pred_region
      _
    $region29: #{mlp_forward_batched.1} parent=1 // pred_fallthru
      _
    // Predicated region
    $region30: #{mlp_forward_batched.1} parent=1 // pred_check
      _
    $region31: #{mlp_forward_batched.1} parent=1 // pred_check_branch
      %464 = sbr.rel (0) target = $region33
    $region32: #{mlp_forward_batched.1} parent=1 // pred_region
      _
    $region33: #{mlp_forward_batched.1} parent=1 // pred_fallthru
      _
    %465 = vsyncpa [#allocation3], 1

</llo_original>
